<compile_context>
chip_gen: v7x
topology: tpu7x:2x2x1
jax: 0.10.0
libtpu: 0.0.40
codegen_flags: <defaults>
</compile_context>

<pallas_src>
import functools

import jax
import jax.numpy as jnp
from jax.experimental import pallas as pl
from jax.experimental.pallas import tpu as pltpu

LATENT_DIM = 16
# TODO(synk): condition_dim = len(scaler_X.feature_names_in_) is external; fixed to 8 here.
CONDITION_DIM = 8
IN_DIM = LATENT_DIM + CONDITION_DIM      # 24
IN_PAD = 32                              # packed/zero-padded feature dim fed to the kernel
HIDDEN_DIM = 64
OUTPUT_DIM = 1


def _generator_kernel(x_ref, w1_ref, b1_ref, w2_ref, b2_ref, o_ref):
    # x_ref : (32, TB) bf16   -- [z | cond | zeros] transposed, batch along lanes
    # w1_ref: (64, 32) bf16   -- PyTorch W1 (out,in) zero-padded to in=32, resident in VMEM
    # b1_ref: (64, 1)  f32    -- resident
    # w2_ref: (1, 64)  bf16   -- resident
    # b2_ref: (1, 1)   f32    -- resident
    # o_ref : (1, TB)  f32    -- lane-dense output slab

    # Layer 1: single merged MXU dot, f32 accumulation.
    h = jnp.dot(w1_ref[...], x_ref[...], preferred_element_type=jnp.float32)   # (64, TB)
    # Bias + ReLU + bf16 cast as one fused elementwise pass (keep f32 math; v5e-friendly).
    h = jnp.maximum(h + b1_ref[...], 0.0)                                      # (64, TB) f32

    # Layer 2: (1,64) x (64,TB) -> (1,TB); no transposes needed in this orientation.
    y = jnp.dot(w2_ref[...], h.astype(jnp.bfloat16),
                preferred_element_type=jnp.float32)                            # (1, TB) f32
    y = y + b2_ref[...]                                                        # broadcast (1,1)

    # Sigmoid: exp on the EUP, approx reciprocal also on the EUP (no f32 divide).
    o_ref[...] = pl.reciprocal(1.0 + jnp.exp(-y), approx=True)


def init_params(key):
    """PyTorch-style Linear params in PyTorch layout: W (out,in), b (out,), all f32."""
    k1, k2, k3, k4 = jax.random.split(key, 4)
    bound1 = 1.0 / jnp.sqrt(IN_DIM)
    bound2 = 1.0 / jnp.sqrt(HIDDEN_DIM)
    w1 = jax.random.uniform(k1, (HIDDEN_DIM, IN_DIM), jnp.float32, -bound1, bound1)
    b1 = jax.random.uniform(k2, (HIDDEN_DIM,), jnp.float32, -bound1, bound1)
    w2 = jax.random.uniform(k3, (OUTPUT_DIM, HIDDEN_DIM), jnp.float32, -bound2, bound2)
    b2 = jax.random.uniform(k4, (OUTPUT_DIM,), jnp.float32, -bound2, bound2)
    return (w1, b1, w2, b2)


def pack_params(params):
    """One-time conversion to kernel dtypes/layouts (hoisted out of the per-call hot path)."""
    w1, b1, w2, b2 = params
    w1k = jnp.pad(w1, ((0, 0), (0, IN_PAD - IN_DIM))).astype(jnp.bfloat16)     # (64, 32) bf16
    b1k = b1.reshape(HIDDEN_DIM, 1).astype(jnp.float32)                        # (64, 1)  f32
    w2k = w2.reshape(OUTPUT_DIM, HIDDEN_DIM).astype(jnp.bfloat16)              # (1, 64)  bf16
    b2k = b2.reshape(1, 1).astype(jnp.float32)                                 # (1, 1)   f32
    return (w1k, b1k, w2k, b2k)


@functools.partial(jax.jit, static_argnames=("block_b",))
def generator_forward(z, cond, packed_params, *, block_b=4096):
    """z: (B, 16) f32, cond: (B, 8) f32 -> (B, 1) f32.  packed_params from pack_params()."""
    w1k, b1k, w2k, b2k = packed_params
    B = z.shape[0]

    assert block_b % 128 == 0 and block_b >= 128, "block_b must be a positive multiple of 128"
    # Batch tile: multiple of 128 (lane-dense output), clamped so the grid keeps G >= 2 when
    # B > 128 (the grid is the only source of dual-TC parallelism on v7x).  Sweep block_b in
    # 4096-8192 for very large batches; per-step VMEM is ~0.3 MiB even double-buffered.
    half = pl.cdiv(pl.cdiv(B, 128), 2) * 128          # ceil(ceil(B/128)/2) * 128
    TB = max(128, min(block_b, half))
    G = pl.cdiv(B, TB)
    Bp = G * TB

    # Pack [z | cond] feature-major as a single bf16 slab (one wrapper pass):
    #   rows 0..15 = z^T, rows 16..23 = cond^T, rows 24..31 = zeros; columns padded to Bp.
    # Padded columns produce harmless garbage outputs that are sliced off below.
    xT = jnp.concatenate([z.astype(jnp.bfloat16).T, cond.astype(jnp.bfloat16).T], axis=0)
    xT = jnp.pad(xT, ((0, IN_PAD - IN_DIM), (0, Bp - B)))                       # (32, Bp) bf16

    out = pl.pallas_call(
        _generator_kernel,
        out_shape=jax.ShapeDtypeStruct((1, Bp), jnp.float32),
        grid_spec=pltpu.PrefetchScalarGridSpec(
            num_scalar_prefetch=0,
            grid=(G,),
            in_specs=[
                pl.BlockSpec((IN_PAD, TB), lambda i: (0, i)),
                # weights/biases: constant index_map -> stay resident in VMEM across steps
                pl.BlockSpec((HIDDEN_DIM, IN_PAD), lambda i: (0, 0)),
                pl.BlockSpec((HIDDEN_DIM, 1), lambda i: (0, 0)),
                pl.BlockSpec((1, HIDDEN_DIM), lambda i: (0, 0)),
                pl.BlockSpec((1, 1), lambda i: (0, 0)),
            ],
            out_specs=pl.BlockSpec((1, TB), lambda i: (0, i)),
        ),
        compiler_params=pltpu.CompilerParams(
            # batch tiles are independent -> shard across both TensorCores on v7x
            dimension_semantics=("parallel",)),
    )(xT, w1k, b1k, w2k, b2k)

    # Lane-major slab -> (B, 1) for PyTorch-parity; this final copy is only B*4 bytes.
    return out[0, :B, None]


def _reference_forward(z, cond, params):
    """Pure-JAX f32 reference matching the PyTorch forward (PyTorch param layout)."""
    w1, b1, w2, b2 = params
    x = jnp.concatenate([z, cond], axis=1)
    h = jnp.maximum(x @ w1.T + b1, 0.0)
    return jax.nn.sigmoid(h @ w2.T + b2)


if __name__ == "__main__":
    key = jax.random.PRNGKey(0)
    kp, kz, kc = jax.random.split(key, 3)

    B = 200  # small; not a multiple of 128 -> exercises padding; grid has G=2 tiles (TB=128)
    params = init_params(kp)
    packed = pack_params(params)
    z = jax.random.normal(kz, (B, LATENT_DIM), jnp.float32)
    cond = jax.random.normal(kc, (B, CONDITION_DIM), jnp.float32)

    out = generator_forward(z, cond, packed, block_b=4096)
    out = jax.block_until_ready(out)

    ref = _reference_forward(z, cond, params)
    assert out.shape == (B, OUTPUT_DIM), out.shape
    # bf16 matmuls + approx reciprocal vs f32 reference -> loose but meaningful tolerance.
    max_err = float(jnp.max(jnp.abs(out - ref)))
    assert max_err < 1e-2, f"mismatch vs reference, max abs err = {max_err}"

    print("KERNEL_OK")
</pallas_src>

<mosaic_0001>
module attributes {stable_mosaic.version = 11 : i64} {
  func.func @_generator_kernel(%arg0: i32, %arg1: memref<32x128xbf16, #tpu.memory_space<vmem>>, %arg2: memref<64x32xbf16, #tpu.memory_space<vmem>>, %arg3: memref<64x1xf32, #tpu.memory_space<vmem>>, %arg4: memref<1x64xbf16, #tpu.memory_space<vmem>>, %arg5: memref<1x1xf32, #tpu.memory_space<vmem>>, %arg6: memref<1x128xf32, #tpu.memory_space<vmem>>) attributes {dimension_semantics = [#tpu.dimension_semantics<parallel>], iteration_bounds = array<i64: 2>, scalar_prefetch = 0 : i64, scratch_operands = 0 : i64, tpu.core_type = #tpu.core_type<tc>, window_params = [{transform_indices = @transform_0, window_bounds = array<i64: 32, 128>}, {pipeline_mode = #tpu.pipeline_mode<synchronous>, transform_indices = @transform_1, window_bounds = array<i64: 64, 32>}, {pipeline_mode = #tpu.pipeline_mode<synchronous>, transform_indices = @transform_2, window_bounds = array<i64: 64, 1>}, {pipeline_mode = #tpu.pipeline_mode<synchronous>, transform_indices = @transform_3, window_bounds = array<i64: 1, 64>}, {pipeline_mode = #tpu.pipeline_mode<synchronous>, transform_indices = @transform_4, window_bounds = array<i64: 1, 1>}, {transform_indices = @transform_5, window_bounds = array<i64: 1, 128>}]} {
    %c0 = arith.constant 0 : index
    %c0_0 = arith.constant 0 : index
    %0 = vector.load %arg2[%c0, %c0_0] : memref<64x32xbf16, #tpu.memory_space<vmem>>, vector<64x32xbf16>
    %c0_1 = arith.constant 0 : index
    %c0_2 = arith.constant 0 : index
    %1 = vector.load %arg1[%c0_1, %c0_2] : memref<32x128xbf16, #tpu.memory_space<vmem>>, vector<32x128xbf16>
    %cst = arith.constant dense<0.000000e+00> : vector<64x128xf32>
    %2 = tpu.matmul %0, %1, %cst {dimension_numbers = #tpu.dot_dimension_numbers<[1], [0], [0], [1], [0, 0, 1, 1], [], []>} : vector<64x32xbf16>, vector<32x128xbf16>, vector<64x128xf32> -> vector<64x128xf32>
    %c0_3 = arith.constant 0 : index
    %c0_4 = arith.constant 0 : index
    %3 = vector.load %arg3[%c0_3, %c0_4] : memref<64x1xf32, #tpu.memory_space<vmem>>, vector<64x1xf32>
    %4 = vector.broadcast %3 : vector<64x1xf32> to vector<64x128xf32>
    %5 = arith.addf %2, %4 : vector<64x128xf32>
    %cst_5 = arith.constant 0.000000e+00 : f32
    %6 = vector.broadcast %cst_5 : f32 to vector<64x128xf32>
    %7 = arith.maximumf %5, %6 : vector<64x128xf32>
    %c0_6 = arith.constant 0 : index
    %c0_7 = arith.constant 0 : index
    %8 = vector.load %arg4[%c0_6, %c0_7] : memref<1x64xbf16, #tpu.memory_space<vmem>>, vector<1x64xbf16>
    %9 = arith.truncf %7 : vector<64x128xf32> to vector<64x128xbf16>
    %cst_8 = arith.constant dense<0.000000e+00> : vector<1x128xf32>
    %10 = tpu.matmul %8, %9, %cst_8 {dimension_numbers = #tpu.dot_dimension_numbers<[1], [0], [0], [1], [0, 0, 1, 1], [], []>} : vector<1x64xbf16>, vector<64x128xbf16>, vector<1x128xf32> -> vector<1x128xf32>
    %c0_9 = arith.constant 0 : index
    %c0_10 = arith.constant 0 : index
    %11 = vector.load %arg5[%c0_9, %c0_10] : memref<1x1xf32, #tpu.memory_space<vmem>>, vector<1x1xf32>
    %12 = vector.broadcast %11 : vector<1x1xf32> to vector<1x128xf32>
    %13 = arith.addf %10, %12 : vector<1x128xf32>
    %cst_11 = arith.constant 0.000000e+00 : f32
    %14 = vector.broadcast %cst_11 : f32 to vector<1x128xf32>
    %15 = arith.subf %14, %13 : vector<1x128xf32>
    %16 = math.exp %15 : vector<1x128xf32>
    %cst_12 = arith.constant 1.000000e+00 : f32
    %17 = vector.broadcast %cst_12 : f32 to vector<1x128xf32>
    %18 = arith.addf %17, %16 : vector<1x128xf32>
    %19 = tpu.reciprocal %18 {approx = true} : vector<1x128xf32> -> vector<1x128xf32>
    %c0_13 = arith.constant 0 : index
    %c0_14 = arith.constant 0 : index
    %20 = vector.load %arg6[%c0_13, %c0_14] : memref<1x128xf32, #tpu.memory_space<vmem>>, vector<1x128xf32>
    tpu.vector_store %arg6[%c0_13, %c0_14], %19 {strides = array<i32>} : memref<1x128xf32, #tpu.memory_space<vmem>>, vector<1x128xf32>,
    return
  }
  func.func @transform_0(%arg0: i32) -> (i32, i32) {
    %c0_i32 = arith.constant 0 : i32
    %c0_i32_0 = arith.constant 0 : i32
    return %c0_i32, %arg0 : i32, i32
  }
  func.func @transform_1(%arg0: i32) -> (i32, i32) {
    %c0_i32 = arith.constant 0 : i32
    %c0_i32_0 = arith.constant 0 : i32
    %c0_i32_1 = arith.constant 0 : i32
    return %c0_i32, %c0_i32_0 : i32, i32
  }
  func.func @transform_2(%arg0: i32) -> (i32, i32) {
    %c0_i32 = arith.constant 0 : i32
    %c0_i32_0 = arith.constant 0 : i32
    %c0_i32_1 = arith.constant 0 : i32
    return %c0_i32, %c0_i32_0 : i32, i32
  }
  func.func @transform_3(%arg0: i32) -> (i32, i32) {
    %c0_i32 = arith.constant 0 : i32
    %c0_i32_0 = arith.constant 0 : i32
    %c0_i32_1 = arith.constant 0 : i32
    return %c0_i32, %c0_i32_0 : i32, i32
  }
  func.func @transform_4(%arg0: i32) -> (i32, i32) {
    %c0_i32 = arith.constant 0 : i32
    %c0_i32_0 = arith.constant 0 : i32
    %c0_i32_1 = arith.constant 0 : i32
    return %c0_i32, %c0_i32_0 : i32, i32
  }
  func.func @transform_5(%arg0: i32) -> (i32, i32) {
    %c0_i32 = arith.constant 0 : i32
    %c0_i32_0 = arith.constant 0 : i32
    return %c0_i32, %arg0 : i32, i32
  }
}

</mosaic_0001>

<llo_original>
// kernel: generator_forward.1
$region0: #{generator_forward.1}
  #allocation0 [shape = 'u32[]', space=smem, size = 0x4, offset = 0x4, fixed_abs, tag = 'smem constant byte address 0x4 - core index']
  #allocation1 [shape = 'u32[144,128]{1,0:T(1,128)}', space=vmem, size = 0x12000, scoped, tag = 'internal scratch']
  #allocation2 [shape = 'f32[1,1]{1,0:T(1,128)S(1)}', space=vmem, size = 0x200, scoped, tag = 'scoped memory for generator_forward.1']
  %s0 = inlined_call_operand.vmem [shape: bf16[32,256], index: 0, kind: input, shape index: {}]
  %s1 = inlined_call_operand.vmem [shape: bf16[64,32], index: 1, kind: input, shape index: {}]
  %s2 = inlined_call_operand.vmem [shape: f32[64,1], index: 2, kind: input, shape index: {}]
  %s3 = inlined_call_operand.vmem [shape: bf16[1,64], index: 3, kind: input, shape index: {}]
  %s4 = inlined_call_operand.<no memory space> [shape: f32[1,1], index: 4, kind: input, shape index: {}]
  %s5 = inlined_call_operand.vmem [shape: f32[1,256], index: 5, kind: output, shape index: {}]
  %s6 = sld [smem:[#allocation0]]
  $region94: #{generator_forward.1} parent=0
    _
  %s8 = ssub.s32 1, %s6
  %s9 = scalar_select 0, %s8, %s6
  %v10 = vstv %s4
  %11 = vst [vmem:[#allocation2] sm:$0x1] %v10
  $region1: #{generator_forward.1} parent=0
    #allocation3 [shape = 'u8[16384]{0}', space=vmem, size = 0x4000, scoped, tag = 'input window, operand 0']
    loop: start=0, step=1, limit=4
    $region2: #{generator_forward.1} parent=1 // loop_pre_header
      _
    $region3: #{generator_forward.1} parent=1 // loop_header
      %s13 = sphi 0, %s17
      %p14 = scmp.ge.s32.totalorder %s13, 4
      %s23 = sphi 0, %s25
      %s26 = sphi 0, %s23
      %s27 = sphi 0, %s26
      %s43 = sphi 0, %s27
      %s47 = sphi 0, %s47
      %s49 = sphi 0, %s47
      %s50 = sphi 0, %s49
      %s64 = sphi 0, %s50
      %s68 = sphi 0, %s68
      %s70 = sphi 0, %s68
      %s71 = sphi 0, %s70
      %s85 = sphi 0, %s71
      %s89 = sphi 0, %s89
      %s91 = sphi 0, %s89
      %s92 = sphi 0, %s91
      %s106 = sphi 0, %s92
      %s110 = sphi 0, %s110
      %s112 = sphi 0, %s110
      %s113 = sphi 0, %s112
      %s127 = sphi 0, %s113
      %s133 = sphi 0, %s135
      %s136 = sphi 0, %s133
      %s137 = sphi 0, %s136
      %s153 = sphi 0, %s137
    $region4: #{generator_forward.1} parent=1 // loop_header_branch
      %16 = sbr.rel (%p14) target = $region8
    $region5: #{generator_forward.1} parent=1 // loop_body
      %s18 = ssub.s32 %s13, 1
      %s19 = ssub.s32 %s13, 2
      %s20 = sadd.s32 %s13, 1
      %s21 = ssub.s32 %s13, %s20
      %p22 = scmp.eq.s32.totalorder %s21, 0
      %s24 = sadd.s32 %s23, 1
      %s25 = scalar_select %p22, %s23, %s24
      %p28 = pneg %p22
      %p29 = scmp.eq.s32.totalorder %s13, 1
      %p30 = por %p28, %p29
      %p31 = scmp.ne.s32.totalorder %s23, %s26
      %p32 = scmp.eq.s32.totalorder %s13, 0
      %p33 = por %p31, %p32
      %p34 = scmp.ne.s32.totalorder %s23, %s26
      %p35 = scmp.eq.s32.totalorder %s18, 1
      %p36 = por %p34, %p35
      %p37 = scmp.ne.s32.totalorder %s26, %s27
      %p38 = scmp.eq.s32.totalorder %s18, 0
      %p39 = por %p37, %p38
      %p40 = scmp.ne.s32.totalorder %s26, %s27
      %p41 = scmp.eq.s32.totalorder %s19, 1
      %p42 = por %p40, %p41
      %p44 = scmp.ne.s32.totalorder %s27, %s43
      %p45 = scmp.eq.s32.totalorder %s19, 0
      %p46 = por %p44, %p45
      %s48 = sadd.s32 %s47, 1
      %p51 = scmp.eq.s32.totalorder %s13, 1
      %p52 = scmp.ne.s32.totalorder %s47, %s49
      %p53 = scmp.eq.s32.totalorder %s13, 0
      %p54 = por %p52, %p53
      %p55 = scmp.ne.s32.totalorder %s47, %s49
      %p56 = scmp.eq.s32.totalorder %s18, 1
      %p57 = por %p55, %p56
      %p58 = scmp.ne.s32.totalorder %s49, %s50
      %p59 = scmp.eq.s32.totalorder %s18, 0
      %p60 = por %p58, %p59
      %p61 = scmp.ne.s32.totalorder %s49, %s50
      %p62 = scmp.eq.s32.totalorder %s19, 1
      %p63 = por %p61, %p62
      %p65 = scmp.ne.s32.totalorder %s50, %s64
      %p66 = scmp.eq.s32.totalorder %s19, 0
      %p67 = por %p65, %p66
      %s69 = sadd.s32 %s68, 1
      %p72 = scmp.eq.s32.totalorder %s13, 1
      %p73 = scmp.ne.s32.totalorder %s68, %s70
      %p74 = scmp.eq.s32.totalorder %s13, 0
      %p75 = por %p73, %p74
      %p76 = scmp.ne.s32.totalorder %s68, %s70
      %p77 = scmp.eq.s32.totalorder %s18, 1
      %p78 = por %p76, %p77
      %p79 = scmp.ne.s32.totalorder %s70, %s71
      %p80 = scmp.eq.s32.totalorder %s18, 0
      %p81 = por %p79, %p80
      %p82 = scmp.ne.s32.totalorder %s70, %s71
      %p83 = scmp.eq.s32.totalorder %s19, 1
      %p84 = por %p82, %p83
      %p86 = scmp.ne.s32.totalorder %s71, %s85
      %p87 = scmp.eq.s32.totalorder %s19, 0
      %p88 = por %p86, %p87
      %s90 = sadd.s32 %s89, 1
      %p93 = scmp.eq.s32.totalorder %s13, 1
      %p94 = scmp.ne.s32.totalorder %s89, %s91
      %p95 = scmp.eq.s32.totalorder %s13, 0
      %p96 = por %p94, %p95
      %p97 = scmp.ne.s32.totalorder %s89, %s91
      %p98 = scmp.eq.s32.totalorder %s18, 1
      %p99 = por %p97, %p98
      %p100 = scmp.ne.s32.totalorder %s91, %s92
      %p101 = scmp.eq.s32.totalorder %s18, 0
      %p102 = por %p100, %p101
      %p103 = scmp.ne.s32.totalorder %s91, %s92
      %p104 = scmp.eq.s32.totalorder %s19, 1
      %p105 = por %p103, %p104
      %p107 = scmp.ne.s32.totalorder %s92, %s106
      %p108 = scmp.eq.s32.totalorder %s19, 0
      %p109 = por %p107, %p108
      %s111 = sadd.s32 %s110, 1
      %p114 = scmp.eq.s32.totalorder %s13, 1
      %p115 = scmp.ne.s32.totalorder %s110, %s112
      %p116 = scmp.eq.s32.totalorder %s13, 0
      %p117 = por %p115, %p116
      %p118 = scmp.ne.s32.totalorder %s110, %s112
      %p119 = scmp.eq.s32.totalorder %s18, 1
      %p120 = por %p118, %p119
      %p121 = scmp.ne.s32.totalorder %s112, %s113
      %p122 = scmp.eq.s32.totalorder %s18, 0
      %p123 = por %p121, %p122
      %p124 = scmp.ne.s32.totalorder %s112, %s113
      %p125 = scmp.eq.s32.totalorder %s19, 1
      %p126 = por %p124, %p125
      %p128 = scmp.ne.s32.totalorder %s113, %s127
      %p129 = scmp.eq.s32.totalorder %s19, 0
      %p130 = por %p128, %p129
      %s131 = ssub.s32 %s13, %s20
      %p132 = scmp.eq.s32.totalorder %s131, 0
      %s134 = sadd.s32 %s133, 1
      %s135 = scalar_select %p132, %s133, %s134
      %p138 = pneg %p132
      %p139 = scmp.eq.s32.totalorder %s13, 1
      %p140 = por %p138, %p139
      %p141 = scmp.ne.s32.totalorder %s133, %s136
      %p142 = scmp.eq.s32.totalorder %s13, 0
      %p143 = por %p141, %p142
      %p144 = scmp.ne.s32.totalorder %s133, %s136
      %p145 = scmp.eq.s32.totalorder %s18, 1
      %p146 = por %p144, %p145
      %p147 = scmp.ne.s32.totalorder %s136, %s137
      %p148 = scmp.eq.s32.totalorder %s18, 0
      %p149 = por %p147, %p148
      %p150 = scmp.ne.s32.totalorder %s136, %s137
      %p151 = scmp.eq.s32.totalorder %s19, 1
      %p152 = por %p150, %p151
      %p154 = scmp.ne.s32.totalorder %s137, %s153
      %p155 = scmp.eq.s32.totalorder %s19, 0
      %p156 = por %p154, %p155
      %p157 = scmp.le.s32.totalorder 1, %s13
      %p158 = scmp.lt.s32.totalorder %s13, 3
      %p159 = pnand %p157, %p158
      %p160 = pneg %p159
      // Predicated region
      $region9: #{generator_forward.1} parent=5 // pred_check
        _
      $region10: #{generator_forward.1} parent=5 // pred_check_branch
        %162 = sbr.rel (%p159) target = $region12
      $region11: #{generator_forward.1} parent=5 // pred_region
        %s163 = ssub.s32 %s13, 1
        // Predicated region
        $region13: #{generator_forward.1} parent=11 // pred_check
          %p164 = pneg %p60
        $region14: #{generator_forward.1} parent=11 // pred_check_branch
          %166 = sbr.rel (%p164) target = $region16
        $region15: #{generator_forward.1} parent=11 // pred_region
          _
        $region16: #{generator_forward.1} parent=11 // pred_fallthru
          _
        // Predicated region
        $region17: #{generator_forward.1} parent=11 // pred_check
          %p167 = pneg %p81
        $region18: #{generator_forward.1} parent=11 // pred_check_branch
          %169 = sbr.rel (%p167) target = $region20
        $region19: #{generator_forward.1} parent=11 // pred_region
          _
        $region20: #{generator_forward.1} parent=11 // pred_fallthru
          _
        // Predicated region
        $region21: #{generator_forward.1} parent=11 // pred_check
          %p170 = pneg %p102
        $region22: #{generator_forward.1} parent=11 // pred_check_branch
          %172 = sbr.rel (%p170) target = $region24
        $region23: #{generator_forward.1} parent=11 // pred_region
          _
        $region24: #{generator_forward.1} parent=11 // pred_fallthru
          _
        // Predicated region
        $region25: #{generator_forward.1} parent=11 // pred_check
          %p173 = pneg %p123
        $region26: #{generator_forward.1} parent=11 // pred_check_branch
          %175 = sbr.rel (%p173) target = $region28
        $region27: #{generator_forward.1} parent=11 // pred_region
          _
        $region28: #{generator_forward.1} parent=11 // pred_fallthru
          _
      $region12: #{generator_forward.1} parent=5 // pred_fallthru
        _
      %p176 = scmp.lt.s32.totalorder %s13, 2
      // Predicated region
      $region29: #{generator_forward.1} parent=5 // pred_check
        %p177 = pneg %p176
      $region30: #{generator_forward.1} parent=5 // pred_check_branch
        %179 = sbr.rel (%p177) target = $region32
      $region31: #{generator_forward.1} parent=5 // pred_region
        // Predicated region
        $region33: #{generator_forward.1} parent=31 // pred_check
          %p180 = pneg %p33
        $region34: #{generator_forward.1} parent=31 // pred_check_branch
          %182 = sbr.rel (%p180) target = $region36
        $region35: #{generator_forward.1} parent=31 // pred_region
          %s183 = sand.u32 %s23, 1
          %s184 = sand.u32 %s23, 1
          %s185 = smul.addr %s184, 16
          %s186 = scalar_lea.vmem [#allocation3], %s185
          %s187 = smul.addr %s13, 4
          %s188 = scalar_lea.vmem %s0, %s187
          // Predicated region
          $region37: #{generator_forward.1} parent=35 // pred_check
            _
          $region38: #{generator_forward.1} parent=35 // pred_check_branch
            %190 = sbr.rel (0) target = $region40
          $region39: #{generator_forward.1} parent=35 // pred_region
            // Predicated region
            $region41: #{generator_forward.1} parent=39 // pred_check
              _
            $region42: #{generator_forward.1} parent=39 // pred_check_branch
              %192 = sbr.rel target = $region44
            $region43: #{generator_forward.1} parent=39 // pred_region
              // Predicated region
              $region56: #{generator_forward.1} parent=43 // pred_check
                _
              $region57: #{generator_forward.1} parent=43 // pred_check_branch
                %213 = sbr.rel (0) target = $region59
              $region58: #{generator_forward.1} parent=43 // pred_region
                loop: start=0, step=1, limit=1
                $region60: #{generator_forward.1} parent=58 // loop_pre_header
                  _
                $region61: #{generator_forward.1} parent=58 // loop_header
                  %s215 = sphi 0, %s219
                  %p216 = scmp.ge.s32.totalorder %s215, 1
                  %s220 = sphi %s188, %s188
                  %s221 = sphi %s186, %s186
                $region62: #{generator_forward.1} parent=58 // loop_header_branch
                  %218 = sbr.rel (%p216) target = $region66
                $region63: #{generator_forward.1} parent=58 // loop_body
                  _
                $region64: #{generator_forward.1} parent=58 // loop_footer
                  %s219 = sadd.s32 1, %s215
                $region65: #{generator_forward.1} parent=58 // loop_footer_branch
                  %214 = sbr.rel target = $region61
                $region66: #{generator_forward.1} parent=58 // loop_exit
                  _
                loop: start=0, step=1, limit=1
                $region67: #{generator_forward.1} parent=58 // loop_pre_header
                  _
                $region68: #{generator_forward.1} parent=58 // loop_header
                  %s224 = sphi 0, %s228
                  %p225 = scmp.ge.s32.totalorder %s224, 1
                  %s229 = sphi %s188, %s188
                  %s230 = sphi %s186, %s186
                $region69: #{generator_forward.1} parent=58 // loop_header_branch
                  %227 = sbr.rel (%p225) target = $region73
                $region70: #{generator_forward.1} parent=58 // loop_body
                  %v231 = vld [vmem:[%s229] sm:$0xf]
                  %232 = vst [vmem:[%s230] sm:$0xf] %v231
                  %v233 = vld [vmem:[%s229 + $0x8] sm:$0xf]
                  %234 = vst [vmem:[%s230 + $0x4] sm:$0xf] %v233
                  %v235 = vld [vmem:[%s229 + $0x10] sm:$0xf]
                  %236 = vst [vmem:[%s230 + $0x8] sm:$0xf] %v235
                  %v237 = vld [vmem:[%s229 + $0x18] sm:$0xf]
                  %238 = vst [vmem:[%s230 + $0xc] sm:$0xf] %v237
                $region71: #{generator_forward.1} parent=58 // loop_footer
                  %s228 = sadd.s32 1, %s224
                $region72: #{generator_forward.1} parent=58 // loop_footer_branch
                  %223 = sbr.rel target = $region68
                $region73: #{generator_forward.1} parent=58 // loop_exit
                  _
              $region59: #{generator_forward.1} parent=43 // pred_fallthru
                _
            $region44: #{generator_forward.1} parent=39 // pred_fallthru
              _
            // Predicated region
            $region45: #{generator_forward.1} parent=39 // pred_check
              _
            $region46: #{generator_forward.1} parent=39 // pred_check_branch
              %194 = sbr.rel (0) target = $region48
            $region47: #{generator_forward.1} parent=39 // pred_region
              loop: start=0, step=1, limit=1
              $region49: #{generator_forward.1} parent=47 // loop_pre_header
                _
              $region50: #{generator_forward.1} parent=47 // loop_header
                %s197 = sphi 0, %s201
                %p198 = scmp.ge.s32.totalorder %s197, 1
                %s202 = sphi %s188, %s188
                %s203 = sphi %s186, %s186
              $region51: #{generator_forward.1} parent=47 // loop_header_branch
                %200 = sbr.rel (%p198) target = $region55
              $region52: #{generator_forward.1} parent=47 // loop_body
                %v204 = vld [vmem:[%s202] sm:$0xf]
                %205 = vst [vmem:[%s203] sm:$0xf] %v204
                %v206 = vld [vmem:[%s202 + $0x8] sm:$0xf]
                %207 = vst [vmem:[%s203 + $0x4] sm:$0xf] %v206
                %v208 = vld [vmem:[%s202 + $0x10] sm:$0xf]
                %209 = vst [vmem:[%s203 + $0x8] sm:$0xf] %v208
                %v210 = vld [vmem:[%s202 + $0x18] sm:$0xf]
                %211 = vst [vmem:[%s203 + $0xc] sm:$0xf] %v210
              $region53: #{generator_forward.1} parent=47 // loop_footer
                %s201 = sadd.s32 1, %s197
              $region54: #{generator_forward.1} parent=47 // loop_footer_branch
                %196 = sbr.rel target = $region50
              $region55: #{generator_forward.1} parent=47 // loop_exit
                _
            $region48: #{generator_forward.1} parent=39 // pred_fallthru
              _
          $region40: #{generator_forward.1} parent=35 // pred_fallthru
            _
          %239 = vnop
        $region36: #{generator_forward.1} parent=31 // pred_fallthru
          _
      $region32: #{generator_forward.1} parent=5 // pred_fallthru
        _
      %p240 = scmp.le.s32.totalorder 1, %s13
      %p241 = scmp.lt.s32.totalorder %s13, 3
      %p242 = pnand %p240, %p241
      %p243 = pneg %p242
      // Predicated region
      $region74: #{generator_forward.1} parent=5 // pred_check
        _
      $region75: #{generator_forward.1} parent=5 // pred_check_branch
        %245 = sbr.rel (%p242) target = $region77
      $region76: #{generator_forward.1} parent=5 // pred_region
        %s246 = ssub.s32 %s13, 1
        %s247 = sand.u32 %s26, 1
        %s248 = sand.u32 %s26, 1
        %s249 = smul.addr %s248, 16
        %s250 = scalar_lea.vmem [#allocation3], %s249
        // Predicated region
        $region78: #{generator_forward.1} parent=76 // pred_check
          %p251 = pneg %p39
        $region79: #{generator_forward.1} parent=76 // pred_check_branch
          %253 = sbr.rel (%p251) target = $region81
        $region80: #{generator_forward.1} parent=76 // pred_region
          _
        $region81: #{generator_forward.1} parent=76 // pred_fallthru
          _
        %s254 = sand.u32 %s26, 1
        %s255 = sand.u32 %s26, 1
        %s256 = smul.addr %s255, 16
        %s257 = scalar_lea.vmem [#allocation3], %s256
        %p258 = pneg %p39
        %p259 = pneg %p36
        %p260 = pneg %p60
        %p261 = pneg %p57
        %p262 = pneg %p81
        %p263 = pneg %p78
        %p264 = pneg %p102
        %p265 = pneg %p99
        %p266 = pneg %p123
        %p267 = pneg %p120
        %p268 = pneg %p149
        %p269 = pneg %p146
        %p270 = scmp.lt.s32.totalorder %s18, 1
        %s271 = scalar_select %p270, %s18, 1
        %s272 = scalar_lea.vmem %s5, %s271
        %p273 = scmp.lt.s32.totalorder %s18, 1
        %s274 = scalar_select %p273, %s18, 1
        %s275 = scalar_lea.vmem %s5, %s274
        %v277 = vld [vmem:[%s1] sm:$0xf]
        %v278 = vld [vmem:[%s1 + $0x4] sm:$0xf]
        %v279 = vld [vmem:[%s1 + $0x8] sm:$0xf]
        %v280 = vld [vmem:[%s1 + $0xc] sm:$0xf]
        %v281 = vld [vmem:[%s1 + $0x10] sm:$0xf]
        %v282 = vld [vmem:[%s1 + $0x14] sm:$0xf]
        %v283 = vld [vmem:[%s1 + $0x18] sm:$0xf]
        %v284 = vld [vmem:[%s1 + $0x1c] sm:$0xf]
        %v285 = vld [vmem:[%s250] sm:$0xf]
        %v286 = vld [vmem:[%s250 + $0x4] sm:$0xf]
        %v287 = vld [vmem:[%s250 + $0x8] sm:$0xf]
        %v288 = vld [vmem:[%s250 + $0xc] sm:$0xf]
        %v289 = vld [vmem:[%s2] sm:$0xff]
        %v290 = vld [vmem:[%s2 + $0x8] sm:$0xff]
        %v291 = vld [vmem:[%s2 + $0x10] sm:$0xff]
        %v292 = vld [vmem:[%s2 + $0x18] sm:$0xff]
        %v293 = vld [vmem:[%s2 + $0x20] sm:$0xff]
        %v294 = vld [vmem:[%s2 + $0x28] sm:$0xff]
        %v295 = vld [vmem:[%s2 + $0x30] sm:$0xff]
        %v296 = vld [vmem:[%s2 + $0x38] sm:$0xff]
        %298 = vset.pattern.permute.xlu0 0
        %299 = vperm.xlu0 %298, %v289
        %v300 = vpop.permute.xlu0 %299
        %303 = vset.pattern.permute.xlu0 0
        %304 = vperm.xlu0 %303, %v290
        %v305 = vpop.permute.xlu0 %304
        %308 = vset.pattern.permute.xlu0 0
        %309 = vperm.xlu0 %308, %v291
        %v310 = vpop.permute.xlu0 %309
        %313 = vset.pattern.permute.xlu0 0
        %314 = vperm.xlu0 %313, %v292
        %v315 = vpop.permute.xlu0 %314
        %318 = vset.pattern.permute.xlu0 0
        %319 = vperm.xlu0 %318, %v293
        %v320 = vpop.permute.xlu0 %319
        %323 = vset.pattern.permute.xlu0 0
        %324 = vperm.xlu0 %323, %v294
        %v325 = vpop.permute.xlu0 %324
        %328 = vset.pattern.permute.xlu0 0
        %329 = vperm.xlu0 %328, %v295
        %v330 = vpop.permute.xlu0 %329
        %333 = vset.pattern.permute.xlu0 0
        %334 = vperm.xlu0 %333, %v296
        %v335 = vpop.permute.xlu0 %334
        %v345 = vunpack.c.l.b16 %v277
        %v346 = vunpack.c.l.b16 %v278
        %v347 = vunpack.c.l.b16 %v279
        %v348 = vunpack.c.l.b16 %v280
        %v349 = vunpack.c.l.b16 %v281
        %v350 = vunpack.c.l.b16 %v282
        %v351 = vunpack.c.l.b16 %v283
        %v352 = vunpack.c.l.b16 %v284
        %v353 = vpack.c.b16 %v346, %v345
        %v354 = vpack.c.b16 %v348, %v347
        %v355 = vpack.c.b16 %v350, %v349
        %v356 = vpack.c.b16 %v352, %v351
        %v361 = vunpack.c.l.b16 %v285
        %v362 = vunpack.c.l.b16 %v286
        %v363 = vunpack.c.l.b16 %v287
        %v364 = vunpack.c.l.b16 %v288
        %v365 = vpack.c.b16 %v362, %v361
        %v366 = vpack.c.b16 %v364, %v363
        %vm369 = vcmask 261120
        %v371 = vsel %vm369, %v353, 0
        %v374 = vsel %vm369, %v354, 0
        %v377 = vsel %vm369, %v355, 0
        %v380 = vsel %vm369, %v356, 0
        %382 = vmatprep.subr.bf16.mxu0 0
        %383 = vmatpush1.bf16.msra.mxu0 %v365
        %384 = vmatprep.subr.bf16.mxu0 0
        %385 = vmatpush1.bf16.msra.mxu0 %v366
        %386 = vmatprep.subr.bf16.mxu0 0
        %387 = vmatpush1.bf16.msra.mxu0 0
        %388 = vmatprep.subr.bf16.mxu0 0
        %389 = vmatpush1.bf16.msra.mxu0 0
        %390 = vmatprep.subr.bf16.mxu0 0
        %391 = vmatpush1.bf16.msra.mxu0 0
        %392 = vmatprep.subr.bf16.mxu0 0
        %393 = vmatpush1.bf16.msra.mxu0 0
        %394 = vmatprep.subr.bf16.mxu0 0
        %395 = vmatpush1.bf16.msra.mxu0 0
        %396 = vmatprep.subr.bf16.mxu0 0
        %397 = vmatpush1.bf16.msra.mxu0 0
        %398 = vmatprep.subr.bf16.mxu0 0
        %399 = vmatpush1.bf16.msra.mxu0 0
        %400 = vmatprep.subr.bf16.mxu0 0
        %401 = vmatpush1.bf16.msra.mxu0 0
        %402 = vmatprep.subr.bf16.mxu0 0
        %403 = vmatpush1.bf16.msra.mxu0 0
        %404 = vmatprep.subr.bf16.mxu0 0
        %405 = vmatpush1.bf16.msra.mxu0 0
        %406 = vmatprep.subr.bf16.mxu0 0
        %407 = vmatpush1.bf16.msra.mxu0 0
        %408 = vmatprep.subr.bf16.mxu0 0
        %409 = vmatpush1.bf16.msra.mxu0 0
        %410 = vmatprep.subr.bf16.mxu0 0
        %411 = vmatpush1.bf16.msra.mxu0 0
        %412 = vmatprep.subr.bf16.mxu0 0
        %413 = vmatpush1.bf16.msra.mxu0 0
        %414 = vmatprep.mubr.bf16.mxu0 0
        %415 = vmatmul.mubr.bf16.gmra.mrb[0].mxu0 %v371
        %v416 = vpop.f32.mrb[0].mxu0
        %v417 = vadd.f32 %v300, %v416
        %v418 = vpop.f32.mrb[0].mxu0
        %v419 = vpop.f32.mrb[0].mxu0
        %v420 = vadd.f32 %v305, %v419
        %v421 = vpop.f32.mrb[0].mxu0
        %422 = vmatprep.mubr.bf16.mxu0 0
        %423 = vmatmul.mubr.bf16.gmra.mrb[0].mxu0 %v374
        %v424 = vpop.f32.mrb[0].mxu0
        %v425 = vadd.f32 %v310, %v424
        %v426 = vpop.f32.mrb[0].mxu0
        %v427 = vpop.f32.mrb[0].mxu0
        %v428 = vadd.f32 %v315, %v427
        %v429 = vpop.f32.mrb[0].mxu0
        %430 = vmatprep.mubr.bf16.mxu0 0
        %431 = vmatmul.mubr.bf16.gmra.mrb[0].mxu0 %v377
        %v432 = vpop.f32.mrb[0].mxu0
        %v433 = vadd.f32 %v320, %v432
        %v434 = vpop.f32.mrb[0].mxu0
        %v435 = vpop.f32.mrb[0].mxu0
        %v436 = vadd.f32 %v325, %v435
        %v437 = vpop.f32.mrb[0].mxu0
        %438 = vmatprep.mubr.bf16.mxu0 0
        %439 = vmatmul.mubr.bf16.gmra.mrb[0].mxu0 %v380
        %v440 = vpop.f32.mrb[0].mxu0
        %v441 = vadd.f32 %v330, %v440
        %v442 = vpop.f32.mrb[0].mxu0
        %v443 = vpop.f32.mrb[0].mxu0
        %v444 = vadd.f32 %v335, %v443
        %v445 = vpop.f32.mrb[0].mxu0
        %446 = vdwg.mxu0
        %v447 = vmax.f32 %v417, 0.0
        %v448 = vmax.f32 %v420, 0.0
        %v449 = vmax.f32 %v425, 0.0
        %v450 = vmax.f32 %v428, 0.0
        %v451 = vmax.f32 %v433, 0.0
        %v452 = vmax.f32 %v436, 0.0
        %v453 = vmax.f32 %v441, 0.0
        %v454 = vmax.f32 %v444, 0.0
        %v455 = vld [vmem:[%s3] sm:$0x1]
        %v456 = vpack.c.bf16 %v448, %v447
        %v457 = vpack.c.bf16 %v450, %v449
        %v458 = vpack.c.bf16 %v452, %v451
        %v459 = vpack.c.bf16 %v454, %v453
        %v460 = vld [vmem:[#allocation2] sm:$0x1]
        %462 = vset.pattern.permute.xlu0 0
        %463 = vperm.xlu0 %462, %v460
        %v464 = vpop.permute.xlu0 %463
        %v466 = vlaneseq
        %v467 = vshrl.u32 %v466, 7
        %v468 = vsub.s32 0, %v467
        %v469 = vrot.slane %v464, %v468
        %vm470 = vcmask 523264
        %v472 = vsel %vm470, %v455, 0
        %474 = vmatprep.subr.bf16.mxu0 0
        %475 = vmatpush1.bf16.msra.mxu0 %v456
        %476 = vmatprep.subr.bf16.mxu0 0
        %477 = vmatpush1.bf16.msra.mxu0 %v457
        %478 = vmatprep.subr.bf16.mxu0 0
        %479 = vmatpush1.bf16.msra.mxu0 %v458
        %480 = vmatprep.subr.bf16.mxu0 0
        %481 = vmatpush1.bf16.msra.mxu0 %v459
        %482 = vmatprep.subr.bf16.mxu0 0
        %483 = vmatpush1.bf16.msra.mxu0 0
        %484 = vmatprep.subr.bf16.mxu0 0
        %485 = vmatpush1.bf16.msra.mxu0 0
        %486 = vmatprep.subr.bf16.mxu0 0
        %487 = vmatpush1.bf16.msra.mxu0 0
        %488 = vmatprep.subr.bf16.mxu0 0
        %489 = vmatpush1.bf16.msra.mxu0 0
        %490 = vmatprep.subr.bf16.mxu0 0
        %491 = vmatpush1.bf16.msra.mxu0 0
        %492 = vmatprep.subr.bf16.mxu0 0
        %493 = vmatpush1.bf16.msra.mxu0 0
        %494 = vmatprep.subr.bf16.mxu0 0
        %495 = vmatpush1.bf16.msra.mxu0 0
        %496 = vmatprep.subr.bf16.mxu0 0
        %497 = vmatpush1.bf16.msra.mxu0 0
        %498 = vmatprep.subr.bf16.mxu0 0
        %499 = vmatpush1.bf16.msra.mxu0 0
        %500 = vmatprep.subr.bf16.mxu0 0
        %501 = vmatpush1.bf16.msra.mxu0 0
        %502 = vmatprep.subr.bf16.mxu0 0
        %503 = vmatpush1.bf16.msra.mxu0 0
        %504 = vmatprep.subr.bf16.mxu0 0
        %505 = vmatpush1.bf16.msra.mxu0 0
        %506 = vmatprep.mubr.bf16.mxu0 0
        %507 = vmatmul.mubr.bf16.gmra.mrb[0].mxu0 %v472
        %v508 = vpop.f32.mrb[0].mxu0
        %v509 = vadd.f32 %v469, %v508
        %v510 = vpop.f32.mrb[0].mxu0
        %v511 = vpop.f32.mrb[0].mxu0
        %v512 = vpop.f32.mrb[0].mxu0
        %513 = vdwg.mxu0
        %v514 = vsub.f32 0.0, %v509
        %v515 = vmul.f32 %v514, 1.442695
        %v516 = vpow.pop %v515
        %v517 = vadd.f32 %v516, 1.0
        %v518 = vrcp.pop %v517
        %519 = vst [vmem:[%s275] sm:$0x1] %v518
        %p520 = scmp.lt.s32.totalorder %s18, 1
        %s521 = scalar_select %p520, %s18, 1
        %s522 = scalar_lea.vmem %s5, %s521
        // Predicated region
        $region82: #{generator_forward.1} parent=76 // pred_check
          %p523 = pneg %p146
        $region83: #{generator_forward.1} parent=76 // pred_check_branch
          %525 = sbr.rel (%p523) target = $region85
        $region84: #{generator_forward.1} parent=76 // pred_region
          _
        $region85: #{generator_forward.1} parent=76 // pred_fallthru
          _
      $region77: #{generator_forward.1} parent=5 // pred_fallthru
        _
      %p526 = scmp.le.s32.totalorder 2, %s13
      // Predicated region
      $region86: #{generator_forward.1} parent=5 // pred_check
        %p527 = pneg %p526
      $region87: #{generator_forward.1} parent=5 // pred_check_branch
        %529 = sbr.rel (%p527) target = $region89
      $region88: #{generator_forward.1} parent=5 // pred_region
        %s530 = ssub.s32 %s13, 2
        // Predicated region
        $region90: #{generator_forward.1} parent=88 // pred_check
          %p531 = pneg %p152
        $region91: #{generator_forward.1} parent=88 // pred_check_branch
          %533 = sbr.rel (%p531) target = $region93
        $region92: #{generator_forward.1} parent=88 // pred_region
          %p534 = scmp.lt.s32.totalorder %s19, 1
          %s535 = scalar_select %p534, %s19, 1
          %s536 = scalar_lea.vmem %s5, %s535
        $region93: #{generator_forward.1} parent=88 // pred_fallthru
          _
      $region89: #{generator_forward.1} parent=5 // pred_fallthru
        _
    $region6: #{generator_forward.1} parent=1 // loop_footer
      %s17 = sadd.s32 1, %s13
    $region7: #{generator_forward.1} parent=1 // loop_footer_branch
      %12 = sbr.rel target = $region3
    $region8: #{generator_forward.1} parent=1 // loop_exit
      _

</llo_original>
